<compile_context>
chip_gen: v5e
topology: v5e:2x2
jax: 0.10.0
libtpu: 0.0.40
codegen_flags: <defaults>
</compile_context>

<pallas_src>
import functools

import jax
import jax.numpy as jnp
from jax import lax
from jax.experimental import pallas as pl
from jax.experimental.pallas import tpu as pltpu

N_EMBD = 10
NUM_HEADS = 2
HEAD_SIZE = 4


def _mha_kernel(x_ref, w_ref, o_ref, *, num_heads, head_size):
    # x_ref: (T, C)      one batch row (batch dim squeezed by the BlockSpec)
    # w_ref: (C, 3K)     fused [Wq * C**-0.5 | Wk | Wv], head-major inside each third
    # o_ref: (T, K)      heads concatenated along the lane axis (== torch.cat(dim=-1))
    x = x_ref[...]
    w = w_ref[...]
    T = x.shape[0]
    K = num_heads * head_size

    # One fused projection matmul for Q, K, V and all heads.  Scale is already
    # folded into the Wq third of w, so q comes out pre-scaled.
    qkv = jnp.dot(x, w, preferred_element_type=jnp.float32)       # (T, 3K)
    q = qkv[:, 0 * K:1 * K]                                       # (T, K), pre-scaled
    k = qkv[:, 1 * K:2 * K]
    v = qkv[:, 2 * K:3 * K]

    # Causal mask, built once (not per head / per kv-step).
    row = lax.broadcasted_iota(jnp.int32, (T, T), 0)
    col = lax.broadcasted_iota(jnp.int32, (T, T), 1)
    causal = col <= row

    # Tiny static unroll over heads (H=2).  TODO(synk): at real head counts fold
    # heads into a grid axis / batched einsum instead of per-head tiny matmuls.
    for h in range(num_heads):
        sl = slice(h * head_size, (h + 1) * head_size)
        q_h, k_h, v_h = q[:, sl], k[:, sl], v[:, sl]

        # q @ k^T: contract the head dims (no materialized transpose).
        wei = lax.dot_general(
            q_h, k_h, (((1,), (1,)), ((), ())),
            preferred_element_type=jnp.float32,
        )                                                         # (T, T)
        wei = jnp.where(causal, wei, -jnp.inf)

        # Numerically stable softmax; approx reciprocal -> EUP slot (vrcp).
        m = jnp.max(wei, axis=-1, keepdims=True)
        e = jnp.exp(wei - m)
        p = e * pl.reciprocal(jnp.sum(e, axis=-1, keepdims=True), approx=True)

        out_h = jnp.dot(p, v_h, preferred_element_type=jnp.float32)   # (T, hs)

        # Per-head direct store into the output lane slice (no trailing concat,
        # bounds live ranges).
        o_ref[:, sl] = out_h.astype(o_ref.dtype)


def build_fused_qkv_weight(wq, wk, wv):
    """ONE-TIME parameter prep (do NOT call per forward).

    wq/wk/wv: (H, C, hs) pre-transposed Linear weights.
    Returns (C, 3*H*hs) fused [Wq * C**-0.5 | Wk | Wv], heads laid out head-major
    along the last axis so the in-kernel lane slices reproduce torch.cat(dim=-1).
    The C**-0.5 scale (C = n_embd, per the PyTorch module) is folded into Wq here.
    """
    H, C, hs = wq.shape
    K = H * hs

    def flat(w):                                   # (H, C, hs) -> (C, H*hs)
        return jnp.transpose(w, (1, 0, 2)).reshape(C, K)

    scale = jnp.asarray(C, jnp.float32) ** -0.5
    return jnp.concatenate([flat(wq) * scale, flat(wk), flat(wv)], axis=-1)


def multi_head_attention(x, w_qkv, num_heads, head_size):
    """x: (B, T, C); w_qkv: (C, 3*H*hs) from build_fused_qkv_weight.

    Returns (B, T, H*hs), matching torch.cat([head(x) for head in heads], dim=-1).
    """
    B, T, C = x.shape
    K = num_heads * head_size

    kernel = functools.partial(_mha_kernel, num_heads=num_heads, head_size=head_size)

    # Grid over batch, marked "parallel": sharded across the 2 TensorCores on v7x,
    # a trivial 2-step loop on v5e/v6e.  Everything fits comfortably in VMEM at
    # these sizes.
    # TODO(synk): pad K (and C) to multiples of 128 for lane-dense stores at real
    # embed widths; here it is noise.
    return pl.pallas_call(
        kernel,
        out_shape=jax.ShapeDtypeStruct((B, T, K), jnp.float32),
        grid=(B,),
        in_specs=[
            pl.BlockSpec((None, T, C), lambda b: (b, 0, 0)),   # one batch row
            pl.BlockSpec((C, 3 * K), lambda b: (0, 0)),        # fused weights
        ],
        out_specs=pl.BlockSpec((None, T, K), lambda b: (b, 0, 0)),
        compiler_params=pltpu.CompilerParams(
            dimension_semantics=("parallel",)),
    )(x, w_qkv)


def _reference(x, wq, wk, wv):
    """Pure-JAX reference reproducing the PyTorch forward exactly."""
    B, T, C = x.shape
    outs = []
    for h in range(wq.shape[0]):
        q = x @ wq[h]
        k = x @ wk[h]
        v = x @ wv[h]
        wei = (q @ jnp.swapaxes(k, -2, -1)) * (C ** -0.5)
        mask = jnp.tril(jnp.ones((T, T), dtype=bool))
        wei = jnp.where(mask, wei, -jnp.inf)
        wei = jax.nn.softmax(wei, axis=-1)
        outs.append(wei @ v)
    return jnp.concatenate(outs, axis=-1)


if __name__ == "__main__":
    key = jax.random.PRNGKey(0)
    kx, kq, kk, kv = jax.random.split(key, 4)

    B, T, C = 2, 8, N_EMBD
    H, hs = NUM_HEADS, HEAD_SIZE

    x = jax.random.normal(kx, (B, T, C), dtype=jnp.float32)
    # Deterministic "Linear(bias=False)" weights, stored pre-transposed as (H, C, hs).
    bound = 1.0 / (C ** 0.5)
    wq = jax.random.uniform(kq, (H, C, hs), jnp.float32, -bound, bound)
    wk = jax.random.uniform(kk, (H, C, hs), jnp.float32, -bound, bound)
    wv = jax.random.uniform(kv, (H, C, hs), jnp.float32, -bound, bound)

    # One-time parameter prep (scale folded into Wq), outside the per-call path.
    w_qkv = build_fused_qkv_weight(wq, wk, wv)

    out = multi_head_attention(x, w_qkv, H, hs)
    jax.block_until_ready(out)

    ref = _reference(x, wq, wk, wv)
    assert out.shape == (B, T, H * hs)
    # Tolerance covers the approximate (EUP vrcp) softmax-denominator reciprocal.
    assert jnp.allclose(out, ref, atol=5e-3, rtol=5e-3), "mismatch vs reference"

    print("KERNEL_OK")
</pallas_src>

<mosaic_0001>
module attributes {stable_mosaic.version = 11 : i64} {
  func.func @_mha_kernel(%arg0: i32, %arg1: memref<1x8x10xf32, #tpu.memory_space<vmem>>, %arg2: memref<10x24xf32, #tpu.memory_space<vmem>>, %arg3: memref<1x8x8xf32, #tpu.memory_space<vmem>>) attributes {dimension_semantics = [#tpu.dimension_semantics<parallel>], iteration_bounds = array<i64: 2>, scalar_prefetch = 0 : i64, scratch_operands = 0 : i64, tpu.core_type = #tpu.core_type<tc>, window_params = [{transform_indices = @transform_0, window_bounds = array<i64: 1, 8, 10>}, {pipeline_mode = #tpu.pipeline_mode<synchronous>, transform_indices = @transform_1, window_bounds = array<i64: 10, 24>}, {transform_indices = @transform_2, window_bounds = array<i64: 1, 8, 8>}]} {
    %c0 = arith.constant 0 : index
    %c0_0 = arith.constant 0 : index
    %c0_1 = arith.constant 0 : index
    %0 = vector.load %arg1[%c0, %c0_0, %c0_1] : memref<1x8x10xf32, #tpu.memory_space<vmem>>, vector<1x8x10xf32>
    %1 = vector.shape_cast %0 : vector<1x8x10xf32> to vector<8x10xf32>
    %c0_2 = arith.constant 0 : index
    %c0_3 = arith.constant 0 : index
    %2 = vector.load %arg2[%c0_2, %c0_3] : memref<10x24xf32, #tpu.memory_space<vmem>>, vector<10x24xf32>
    %cst = arith.constant dense<0.000000e+00> : vector<8x24xf32>
    %3 = tpu.matmul %1, %2, %cst {dimension_numbers = #tpu.dot_dimension_numbers<[1], [0], [0], [1], [0, 0, 1, 1], [], []>} : vector<8x10xf32>, vector<10x24xf32>, vector<8x24xf32> -> vector<8x24xf32>
    %4 = vector.extract_strided_slice %3 {offsets = [0, 0], sizes = [8, 8], strides = [1, 1]} : vector<8x24xf32> to vector<8x8xf32>
    %5 = vector.extract_strided_slice %3 {offsets = [0, 8], sizes = [8, 8], strides = [1, 1]} : vector<8x24xf32> to vector<8x8xf32>
    %6 = vector.extract_strided_slice %3 {offsets = [0, 16], sizes = [8, 8], strides = [1, 1]} : vector<8x24xf32> to vector<8x8xf32>
    %7 = tpu.iota {dimensions = array<i32: 0>} : vector<8x8xi32>
    %8 = tpu.iota {dimensions = array<i32: 1>} : vector<8x8xi32>
    %9 = arith.cmpi sle, %8, %7 : vector<8x8xi32>
    %10 = vector.extract_strided_slice %4 {offsets = [0, 0], sizes = [8, 4], strides = [1, 1]} : vector<8x8xf32> to vector<8x4xf32>
    %11 = vector.extract_strided_slice %5 {offsets = [0, 0], sizes = [8, 4], strides = [1, 1]} : vector<8x8xf32> to vector<8x4xf32>
    %12 = vector.extract_strided_slice %6 {offsets = [0, 0], sizes = [8, 4], strides = [1, 1]} : vector<8x8xf32> to vector<8x4xf32>
    %cst_4 = arith.constant dense<0.000000e+00> : vector<8x8xf32>
    %13 = tpu.matmul %10, %11, %cst_4 {dimension_numbers = #tpu.dot_dimension_numbers<[1], [1], [0], [0], [0, 0, 1, 0], [], []>} : vector<8x4xf32>, vector<8x4xf32>, vector<8x8xf32> -> vector<8x8xf32>
    %cst_5 = arith.constant 0xFF800000 : f32
    %14 = vector.broadcast %cst_5 : f32 to vector<8x8xf32>
    %15 = arith.select %9, %13, %14 : vector<8x8xi1>, vector<8x8xf32>
    %cst_6 = arith.constant dense<0xFF800000> : vector<8xf32>
    %16 = vector.multi_reduction <maximumf>, %15, %cst_6 [1] : vector<8x8xf32> to vector<8xf32>
    %17 = vector.shape_cast %16 : vector<8xf32> to vector<8x1xf32>
    %18 = vector.broadcast %17 : vector<8x1xf32> to vector<8x8xf32>
    %19 = arith.subf %15, %18 : vector<8x8xf32>
    %20 = math.exp %19 : vector<8x8xf32>
    %cst_7 = arith.constant dense<0.000000e+00> : vector<8xf32>
    %21 = vector.multi_reduction <add>, %20, %cst_7 [1] : vector<8x8xf32> to vector<8xf32>
    %22 = vector.shape_cast %21 : vector<8xf32> to vector<8x1xf32>
    %23 = tpu.reciprocal %22 {approx = true} : vector<8x1xf32> -> vector<8x1xf32>
    %24 = vector.broadcast %23 : vector<8x1xf32> to vector<8x8xf32>
    %25 = arith.mulf %20, %24 : vector<8x8xf32>
    %cst_8 = arith.constant dense<0.000000e+00> : vector<8x4xf32>
    %26 = tpu.matmul %25, %12, %cst_8 {dimension_numbers = #tpu.dot_dimension_numbers<[1], [0], [0], [1], [0, 0, 1, 1], [], []>} : vector<8x8xf32>, vector<8x4xf32>, vector<8x4xf32> -> vector<8x4xf32>
    %c0_9 = arith.constant 0 : index
    %c0_10 = arith.constant 0 : index
    %c0_11 = arith.constant 0 : index
    %27 = vector.load %arg3[%c0_9, %c0_10, %c0_11] : memref<1x8x8xf32, #tpu.memory_space<vmem>>, vector<1x8x4xf32>
    %28 = vector.shape_cast %27 : vector<1x8x4xf32> to vector<8x4xf32>
    %29 = vector.shape_cast %26 : vector<8x4xf32> to vector<1x8x4xf32>
    tpu.vector_store %arg3[%c0_9, %c0_10, %c0_11], %29 {strides = array<i32>} : memref<1x8x8xf32, #tpu.memory_space<vmem>>, vector<1x8x4xf32>,
    %30 = vector.extract_strided_slice %4 {offsets = [0, 4], sizes = [8, 4], strides = [1, 1]} : vector<8x8xf32> to vector<8x4xf32>
    %31 = vector.extract_strided_slice %5 {offsets = [0, 4], sizes = [8, 4], strides = [1, 1]} : vector<8x8xf32> to vector<8x4xf32>
    %32 = vector.extract_strided_slice %6 {offsets = [0, 4], sizes = [8, 4], strides = [1, 1]} : vector<8x8xf32> to vector<8x4xf32>
    %cst_12 = arith.constant dense<0.000000e+00> : vector<8x8xf32>
    %33 = tpu.matmul %30, %31, %cst_12 {dimension_numbers = #tpu.dot_dimension_numbers<[1], [1], [0], [0], [0, 0, 1, 0], [], []>} : vector<8x4xf32>, vector<8x4xf32>, vector<8x8xf32> -> vector<8x8xf32>
    %cst_13 = arith.constant 0xFF800000 : f32
    %34 = vector.broadcast %cst_13 : f32 to vector<8x8xf32>
    %35 = arith.select %9, %33, %34 : vector<8x8xi1>, vector<8x8xf32>
    %cst_14 = arith.constant dense<0xFF800000> : vector<8xf32>
    %36 = vector.multi_reduction <maximumf>, %35, %cst_14 [1] : vector<8x8xf32> to vector<8xf32>
    %37 = vector.shape_cast %36 : vector<8xf32> to vector<8x1xf32>
    %38 = vector.broadcast %37 : vector<8x1xf32> to vector<8x8xf32>
    %39 = arith.subf %35, %38 : vector<8x8xf32>
    %40 = math.exp %39 : vector<8x8xf32>
    %cst_15 = arith.constant dense<0.000000e+00> : vector<8xf32>
    %41 = vector.multi_reduction <add>, %40, %cst_15 [1] : vector<8x8xf32> to vector<8xf32>
    %42 = vector.shape_cast %41 : vector<8xf32> to vector<8x1xf32>
    %43 = tpu.reciprocal %42 {approx = true} : vector<8x1xf32> -> vector<8x1xf32>
    %44 = vector.broadcast %43 : vector<8x1xf32> to vector<8x8xf32>
    %45 = arith.mulf %40, %44 : vector<8x8xf32>
    %cst_16 = arith.constant dense<0.000000e+00> : vector<8x4xf32>
    %46 = tpu.matmul %45, %32, %cst_16 {dimension_numbers = #tpu.dot_dimension_numbers<[1], [0], [0], [1], [0, 0, 1, 1], [], []>} : vector<8x8xf32>, vector<8x4xf32>, vector<8x4xf32> -> vector<8x4xf32>
    %c0_17 = arith.constant 0 : index
    %c0_18 = arith.constant 0 : index
    %c4 = arith.constant 4 : index
    %47 = vector.load %arg3[%c0_17, %c0_18, %c4] : memref<1x8x8xf32, #tpu.memory_space<vmem>>, vector<1x8x4xf32>
    %48 = vector.shape_cast %47 : vector<1x8x4xf32> to vector<8x4xf32>
    %49 = vector.shape_cast %46 : vector<8x4xf32> to vector<1x8x4xf32>
    tpu.vector_store %arg3[%c0_17, %c0_18, %c4], %49 {strides = array<i32>} : memref<1x8x8xf32, #tpu.memory_space<vmem>>, vector<1x8x4xf32>,
    return
  }
  func.func @transform_0(%arg0: i32) -> (i32, i32, i32) {
    %c0_i32 = arith.constant 0 : i32
    %c0_i32_0 = arith.constant 0 : i32
    %c0_i32_1 = arith.constant 0 : i32
    return %arg0, %c0_i32, %c0_i32_0 : i32, i32, i32
  }
  func.func @transform_1(%arg0: i32) -> (i32, i32) {
    %c0_i32 = arith.constant 0 : i32
    %c0_i32_0 = arith.constant 0 : i32
    %c0_i32_1 = arith.constant 0 : i32
    return %c0_i32, %c0_i32_0 : i32, i32
  }
  func.func @transform_2(%arg0: i32) -> (i32, i32, i32) {
    %c0_i32 = arith.constant 0 : i32
    %c0_i32_0 = arith.constant 0 : i32
    %c0_i32_1 = arith.constant 0 : i32
    return %arg0, %c0_i32, %c0_i32_0 : i32, i32, i32
  }
}

</mosaic_0001>

<llo_original>
// kernel: tpu_custom_call.1
$region0: #{tpu_custom_call.1}
  #allocation0 [shape = 'u32[]', space=smem, size = 0x4, offset = 0x4, fixed_abs, tag = 'smem constant byte address 0x4 - core index']
  #allocation1 [shape = 'u32[72,128]{1,0:T(1,128)}', space=vmem, size = 0x9000, scoped, tag = 'internal scratch']
  %s0 = inlined_call_operand.hbm [shape: f32[2,8,10], index: 0, kind: input, shape index: {}]
  %s1 = inlined_call_operand.hbm [shape: f32[10,24], index: 1, kind: input, shape index: {}]
  %s2 = inlined_call_operand.hbm [shape: f32[2,8,8], index: 2, kind: output, shape index: {}]
  %s3 = sld [smem:[#allocation0]]
  $region49: #{tpu_custom_call.1} parent=0
    _
  %s5 = ssub.s32 1, %s3
  %s6 = scalar_select 0, %s5, %s3
  $region1: #{tpu_custom_call.1} parent=0
    #allocation2 [shape = 'u8[8192]{0}', space=vmem, size = 0x2000, scoped, tag = 'input window, operand 0']
    #allocation3 [shape = 's32[2]{0}', space=sflag, size = 0x8, scoped, tag = 'scoped memory for tpu_custom_call.1']
    #allocation4 [shape = 's32[2]{0}', space=sflag, size = 0x8, scoped, tag = 'scoped memory for tpu_custom_call.1']
    #allocation5 [shape = 'u8[8192]{0}', space=vmem, size = 0x2000, scoped, tag = 'input window, operand 1, single buffered']
    #allocation6 [shape = 's32[1]{0}', space=sflag, size = 0x4, scoped, tag = 'scoped memory for tpu_custom_call.1']
    #allocation7 [shape = 'u8[8192]{0}', space=vmem, size = 0x2000, scoped, tag = 'output window, operand 0']
    %7 = vsyncpa [#allocation3], 0
    %s8 = scalar_lea.sflag [#allocation3], 1
    %9 = vsyncpa %s8, 0
    %10 = vsyncpa [#allocation6], 0
    %11 = vsyncpa [#allocation4], 0
    %s12 = scalar_lea.sflag [#allocation4], 1
    %13 = vsyncpa %s12, 0
    loop: start=0, step=1, limit=4
    $region2: #{tpu_custom_call.1} parent=1 // loop_pre_header
      _
    $region3: #{tpu_custom_call.1} parent=1 // loop_header
      %s15 = sphi 0, %s19
      %p16 = scmp.ge.s32.totalorder %s15, 4
      %s25 = sphi 0, %s27
      %s28 = sphi 0, %s25
      %s29 = sphi 0, %s28
      %s45 = sphi 0, %s29
      %s49 = sphi 0, %s49
      %s51 = sphi 0, %s49
      %s52 = sphi 0, %s51
      %s66 = sphi 0, %s52
      %s72 = sphi 0, %s74
      %s75 = sphi 0, %s72
      %s76 = sphi 0, %s75
      %s92 = sphi 0, %s76
    $region4: #{tpu_custom_call.1} parent=1 // loop_header_branch
      %18 = sbr.rel (%p16) target = $region8
    $region5: #{tpu_custom_call.1} parent=1 // loop_body
      %s20 = ssub.s32 %s15, 1
      %s21 = ssub.s32 %s15, 2
      %s22 = sadd.s32 %s15, 1
      %s23 = ssub.s32 %s15, %s22
      %p24 = scmp.eq.s32.totalorder %s23, 0
      %s26 = sadd.s32 %s25, 1
      %s27 = scalar_select %p24, %s25, %s26
      %p30 = pneg %p24
      %p31 = scmp.eq.s32.totalorder %s15, 1
      %p32 = por %p30, %p31
      %p33 = scmp.ne.s32.totalorder %s25, %s28
      %p34 = scmp.eq.s32.totalorder %s15, 0
      %p35 = por %p33, %p34
      %p36 = scmp.ne.s32.totalorder %s25, %s28
      %p37 = scmp.eq.s32.totalorder %s20, 1
      %p38 = por %p36, %p37
      %p39 = scmp.ne.s32.totalorder %s28, %s29
      %p40 = scmp.eq.s32.totalorder %s20, 0
      %p41 = por %p39, %p40
      %p42 = scmp.ne.s32.totalorder %s28, %s29
      %p43 = scmp.eq.s32.totalorder %s21, 1
      %p44 = por %p42, %p43
      %p46 = scmp.ne.s32.totalorder %s29, %s45
      %p47 = scmp.eq.s32.totalorder %s21, 0
      %p48 = por %p46, %p47
      %s50 = sadd.s32 %s49, 1
      %p53 = scmp.eq.s32.totalorder %s15, 1
      %p54 = scmp.ne.s32.totalorder %s49, %s51
      %p55 = scmp.eq.s32.totalorder %s15, 0
      %p56 = por %p54, %p55
      %p57 = scmp.ne.s32.totalorder %s49, %s51
      %p58 = scmp.eq.s32.totalorder %s20, 1
      %p59 = por %p57, %p58
      %p60 = scmp.ne.s32.totalorder %s51, %s52
      %p61 = scmp.eq.s32.totalorder %s20, 0
      %p62 = por %p60, %p61
      %p63 = scmp.ne.s32.totalorder %s51, %s52
      %p64 = scmp.eq.s32.totalorder %s21, 1
      %p65 = por %p63, %p64
      %p67 = scmp.ne.s32.totalorder %s52, %s66
      %p68 = scmp.eq.s32.totalorder %s21, 0
      %p69 = por %p67, %p68
      %s70 = ssub.s32 %s15, %s22
      %p71 = scmp.eq.s32.totalorder %s70, 0
      %s73 = sadd.s32 %s72, 1
      %s74 = scalar_select %p71, %s72, %s73
      %p77 = pneg %p71
      %p78 = scmp.eq.s32.totalorder %s15, 1
      %p79 = por %p77, %p78
      %p80 = scmp.ne.s32.totalorder %s72, %s75
      %p81 = scmp.eq.s32.totalorder %s15, 0
      %p82 = por %p80, %p81
      %p83 = scmp.ne.s32.totalorder %s72, %s75
      %p84 = scmp.eq.s32.totalorder %s20, 1
      %p85 = por %p83, %p84
      %p86 = scmp.ne.s32.totalorder %s75, %s76
      %p87 = scmp.eq.s32.totalorder %s20, 0
      %p88 = por %p86, %p87
      %p89 = scmp.ne.s32.totalorder %s75, %s76
      %p90 = scmp.eq.s32.totalorder %s21, 1
      %p91 = por %p89, %p90
      %p93 = scmp.ne.s32.totalorder %s76, %s92
      %p94 = scmp.eq.s32.totalorder %s21, 0
      %p95 = por %p93, %p94
      %p96 = scmp.le.s32.totalorder 1, %s15
      %p97 = scmp.lt.s32.totalorder %s15, 3
      %p98 = pnand %p96, %p97
      %p99 = pneg %p98
      // Predicated region
      $region9: #{tpu_custom_call.1} parent=5 // pred_check
        _
      $region10: #{tpu_custom_call.1} parent=5 // pred_check_branch
        %101 = sbr.rel (%p98) target = $region12
      $region11: #{tpu_custom_call.1} parent=5 // pred_region
        %s102 = ssub.s32 %s15, 1
        // Predicated region
        $region13: #{tpu_custom_call.1} parent=11 // pred_check
          %p103 = pneg %p62
        $region14: #{tpu_custom_call.1} parent=11 // pred_check_branch
          %105 = sbr.rel (%p103) target = $region16
        $region15: #{tpu_custom_call.1} parent=11 // pred_region
          %107 = vsyncadd [#allocation6], 0
          %s108 = sshll.u32 %s1, 4
          %s109 = int_to_ptr.hbm [resolvable:$true] %s108
          %s110 = sshll.u32 [#allocation5], 4
          %s111 = int_to_ptr.vmem [resolvable:$true] %s110
          %116 = dma.hbm_to_vmem [thread:$0]  %s109, 256, %s111, [#allocation6], 128, 128, 8
        $region16: #{tpu_custom_call.1} parent=11 // pred_fallthru
          _
      $region12: #{tpu_custom_call.1} parent=5 // pred_fallthru
        _
      %p117 = scmp.lt.s32.totalorder %s15, 2
      // Predicated region
      $region17: #{tpu_custom_call.1} parent=5 // pred_check
        %p118 = pneg %p117
      $region18: #{tpu_custom_call.1} parent=5 // pred_check_branch
        %120 = sbr.rel (%p118) target = $region20
      $region19: #{tpu_custom_call.1} parent=5 // pred_region
        // Predicated region
        $region21: #{tpu_custom_call.1} parent=19 // pred_check
          %p121 = pneg %p35
        $region22: #{tpu_custom_call.1} parent=19 // pred_check_branch
          %123 = sbr.rel (%p121) target = $region24
        $region23: #{tpu_custom_call.1} parent=19 // pred_region
          %s124 = sand.u32 %s25, 1
          %s125 = scalar_lea.sflag [#allocation3], %s124
          %s126 = sand.u32 %s25, 1
          %s127 = smul.addr %s126, 8
          %s128 = scalar_lea.vmem [#allocation2], %s127
          %130 = vsyncadd %s125, 0
          %s131 = smul.addr %s15, 8
          %s132 = scalar_lea.hbm %s0, %s131
          %s134 = sshll.u32 %s132, 4
          %s135 = int_to_ptr.hbm [resolvable:$true] %s134
          %s136 = sshll.u32 %s128, 4
          %s137 = int_to_ptr.vmem [resolvable:$true] %s136
          %139 = dma.hbm_to_vmem [thread:$0]  %s135, 128, %s137, %s125
        $region24: #{tpu_custom_call.1} parent=19 // pred_fallthru
          _
      $region20: #{tpu_custom_call.1} parent=5 // pred_fallthru
        _
      %p140 = scmp.le.s32.totalorder 1, %s15
      %p141 = scmp.lt.s32.totalorder %s15, 3
      %p142 = pnand %p140, %p141
      %p143 = pneg %p142
      // Predicated region
      $region25: #{tpu_custom_call.1} parent=5 // pred_check
        _
      $region26: #{tpu_custom_call.1} parent=5 // pred_check_branch
        %145 = sbr.rel (%p142) target = $region28
      $region27: #{tpu_custom_call.1} parent=5 // pred_region
        %s146 = ssub.s32 %s15, 1
        %s147 = sand.u32 %s28, 1
        %s148 = scalar_lea.sflag [#allocation3], %s147
        %s149 = sand.u32 %s28, 1
        %s150 = smul.addr %s149, 8
        %s151 = scalar_lea.vmem [#allocation2], %s150
        // Predicated region
        $region29: #{tpu_custom_call.1} parent=27 // pred_check
          %p152 = pneg %p41
        $region30: #{tpu_custom_call.1} parent=27 // pred_check_branch
          %154 = sbr.rel (%p152) target = $region32
        $region31: #{tpu_custom_call.1} parent=27 // pred_region
          %156 = dma.done %s148, 128
        $region32: #{tpu_custom_call.1} parent=27 // pred_fallthru
          _
        // Predicated region
        $region33: #{tpu_custom_call.1} parent=27 // pred_check
          %p157 = pneg %p62
        $region34: #{tpu_custom_call.1} parent=27 // pred_check_branch
          %159 = sbr.rel (%p157) target = $region36
        $region35: #{tpu_custom_call.1} parent=27 // pred_region
          %161 = dma.done [#allocation6], 256
        $region36: #{tpu_custom_call.1} parent=27 // pred_fallthru
          _
        %s162 = sand.u32 %s28, 1
        %s163 = scalar_lea.sflag [#allocation3], %s162
        %s164 = sand.u32 %s28, 1
        %s165 = smul.addr %s164, 8
        %s166 = scalar_lea.vmem [#allocation2], %s165
        %p167 = pneg %p41
        %p168 = pneg %p38
        %p169 = pneg %p62
        %p170 = pneg %p59
        %p171 = pneg %p88
        %p172 = pneg %p85
        %s173 = sand.u32 %s75, 1
        %s174 = scalar_lea.sflag [#allocation4], %s173
        %s175 = sand.u32 %s75, 1
        %s176 = smul.addr %s175, 8
        %s177 = scalar_lea.vmem [#allocation7], %s176
        %v178 = vld [vmem:[%s151] sm:$0xff]
        %v179 = vld [vmem:[#allocation5] sm:$0xff]
        %v180 = vld [vmem:[#allocation5 + $0x8] sm:$0x3]
        %vm181 = vcmask 80896
        %v183 = vsel %vm181, %v178, 0
        %vm185 = vcmask 1041408
        %v187 = vsel %vm185, %v180, 0
        %189 = vmatpush.msra.mxu0 0.0
        %190 = vmatpush.msra.mxu0 0.0
        %191 = vmatpush.msra.mxu0 0.0
        %192 = vmatpush.msra.mxu0 0.0
        %193 = vmatpush.msra.mxu0 0.0
        %194 = vmatpush.msra.mxu0 0.0
        %195 = vmatpush.msra.mxu0 0.0
        %196 = vmatpush.msra.mxu0 0.0
        %197 = vmatpush.msra.mxu0 0.0
        %198 = vmatpush.msra.mxu0 0.0
        %199 = vmatpush.msra.mxu0 0.0
        %200 = vmatpush.msra.mxu0 0.0
        %201 = vmatpush.msra.mxu0 0.0
        %202 = vmatpush.msra.mxu0 0.0
        %203 = vmatpush.msra.mxu0 %v187
        %204 = vmatpush.msra.mxu0 %v179
        %205 = vmatmul.f32.gmra.mxu0 %v183
        %v206 = vpop.f32.mrf.mxu0
        %v207 = vadd.f32 0.0, %v206
        %208 = vdwg.mxu0
        %v209 = vlaneseq
        %v210 = vshrl.u32 %v209, 7
        %v211 = vlaneseq
        %v212 = vand.u32 %v211, 127
        %vm213 = vcmp.le.s32.totalorder %v212, %v210
        %215 = vrot.lane.b32.xlu0 %v207, 120
        %v216 = vpop.permute.xlu0 %215
        %vm217 = vcmask 31744
        %v218 = vsel %vm217, %v207, 0
        %v220 = vsel %vm217, %v216, 0
        %222 = vmatpush.xpose.msra.mxu0 0.0
        %223 = vmatpush.xpose.msra.mxu0 0.0
        %224 = vmatpush.xpose.msra.mxu0 0.0
        %225 = vmatpush.xpose.msra.mxu0 0.0
        %226 = vmatpush.xpose.msra.mxu0 0.0
        %227 = vmatpush.xpose.msra.mxu0 0.0
        %228 = vmatpush.xpose.msra.mxu0 0.0
        %229 = vmatpush.xpose.msra.mxu0 0.0
        %230 = vmatpush.xpose.msra.mxu0 0.0
        %231 = vmatpush.xpose.msra.mxu0 0.0
        %232 = vmatpush.xpose.msra.mxu0 0.0
        %233 = vmatpush.xpose.msra.mxu0 0.0
        %234 = vmatpush.xpose.msra.mxu0 0.0
        %235 = vmatpush.xpose.msra.mxu0 0.0
        %236 = vmatpush.xpose.msra.mxu0 0.0
        %237 = vmatpush.xpose.msra.mxu0 %v220
        %238 = vmatmul.f32.gmra.mxu0 %v218
        %v239 = vpop.f32.mrf.mxu0
        %v240 = vadd.f32 0.0, %v239
        %241 = vdwg.mxu0
        %v242 = vsel %vm213, %v240, -inf
        %vm243 = vcmask 64512
        %v244 = vsel %vm243, %v242, -inf
        %245 = vmax.xlane.f32.xlu0 %v244
        %v246 = vpop.xlane.xlu0 %245
        %v247 = vsub.f32 %v242, %v246
        %v248 = vmul.f32 %v247, 1.442695
        %v249 = vpow.pop %v248
        %v250 = vsel %vm243, %v249, 0.0
        %251 = vadd.xlane.f32.xlu0 %v250
        %v252 = vpop.xlane.xlu0 %251
        %v253 = vrcp.pop %v252
        %v254 = vmul.f32 %v249, %v253
        %255 = vrot.lane.b32.xlu0 %v207, 112
        %v256 = vpop.permute.xlu0 %255
        %v259 = vsel %vm243, %v254, 0
        %261 = vmatpush.msra.mxu0 0.0
        %262 = vmatpush.msra.mxu0 0.0
        %263 = vmatpush.msra.mxu0 0.0
        %264 = vmatpush.msra.mxu0 0.0
        %265 = vmatpush.msra.mxu0 0.0
        %266 = vmatpush.msra.mxu0 0.0
        %267 = vmatpush.msra.mxu0 0.0
        %268 = vmatpush.msra.mxu0 0.0
        %269 = vmatpush.msra.mxu0 0.0
        %270 = vmatpush.msra.mxu0 0.0
        %271 = vmatpush.msra.mxu0 0.0
        %272 = vmatpush.msra.mxu0 0.0
        %273 = vmatpush.msra.mxu0 0.0
        %274 = vmatpush.msra.mxu0 0.0
        %275 = vmatpush.msra.mxu0 0.0
        %276 = vmatpush.msra.mxu0 %v256
        %277 = vmatmul.f32.gmra.mxu0 %v259
        %v278 = vpop.f32.mrf.mxu0
        %v279 = vadd.f32 0.0, %v278
        %280 = vdwg.mxu0
        %281 = vst.msk [vmem:[%s177] sm:$0xff] %vm217, %v279
        %282 = vrot.lane.b32.xlu0 %v207, 124
        %v283 = vpop.permute.xlu0 %282
        %284 = vrot.lane.b32.xlu0 %v207, 116
        %v285 = vpop.permute.xlu0 %284
        %v286 = vsel %vm217, %v283, 0
        %v288 = vsel %vm217, %v285, 0
        %290 = vmatpush.xpose.msra.mxu0 0.0
        %291 = vmatpush.xpose.msra.mxu0 0.0
        %292 = vmatpush.xpose.msra.mxu0 0.0
        %293 = vmatpush.xpose.msra.mxu0 0.0
        %294 = vmatpush.xpose.msra.mxu0 0.0
        %295 = vmatpush.xpose.msra.mxu0 0.0
        %296 = vmatpush.xpose.msra.mxu0 0.0
        %297 = vmatpush.xpose.msra.mxu0 0.0
        %298 = vmatpush.xpose.msra.mxu0 0.0
        %299 = vmatpush.xpose.msra.mxu0 0.0
        %300 = vmatpush.xpose.msra.mxu0 0.0
        %301 = vmatpush.xpose.msra.mxu0 0.0
        %302 = vmatpush.xpose.msra.mxu0 0.0
        %303 = vmatpush.xpose.msra.mxu0 0.0
        %304 = vmatpush.xpose.msra.mxu0 0.0
        %305 = vmatpush.xpose.msra.mxu0 %v288
        %306 = vmatmul.f32.gmra.mxu0 %v286
        %v307 = vpop.f32.mrf.mxu0
        %v308 = vadd.f32 0.0, %v307
        %309 = vdwg.mxu0
        %v310 = vsel %vm213, %v308, -inf
        %v311 = vsel %vm243, %v310, -inf
        %312 = vmax.xlane.f32.xlu0 %v311
        %v313 = vpop.xlane.xlu0 %312
        %v314 = vsub.f32 %v310, %v313
        %v315 = vmul.f32 %v314, 1.442695
        %v316 = vpow.pop %v315
        %v317 = vsel %vm243, %v316, 0.0
        %318 = vadd.xlane.f32.xlu0 %v317
        %v319 = vpop.xlane.xlu0 %318
        %v320 = vrcp.pop %v319
        %v321 = vmul.f32 %v316, %v320
        %322 = vrot.lane.b32.xlu0 %v207, 108
        %v323 = vpop.permute.xlu0 %322
        %v326 = vsel %vm243, %v321, 0
        %328 = vmatpush.msra.mxu0 0.0
        %329 = vmatpush.msra.mxu0 0.0
        %330 = vmatpush.msra.mxu0 0.0
        %331 = vmatpush.msra.mxu0 0.0
        %332 = vmatpush.msra.mxu0 0.0
        %333 = vmatpush.msra.mxu0 0.0
        %334 = vmatpush.msra.mxu0 0.0
        %335 = vmatpush.msra.mxu0 0.0
        %336 = vmatpush.msra.mxu0 0.0
        %337 = vmatpush.msra.mxu0 0.0
        %338 = vmatpush.msra.mxu0 0.0
        %339 = vmatpush.msra.mxu0 0.0
        %340 = vmatpush.msra.mxu0 0.0
        %341 = vmatpush.msra.mxu0 0.0
        %342 = vmatpush.msra.mxu0 0.0
        %343 = vmatpush.msra.mxu0 %v323
        %344 = vmatmul.f32.gmra.mxu0 %v326
        %v345 = vpop.f32.mrf.mxu0
        %v346 = vadd.f32 0.0, %v345
        %347 = vdwg.mxu0
        %349 = vrot.lane.b32.xlu0 %v346, 4
        %v350 = vpop.permute.xlu0 %349
        %vm352 = vcmask 64544
        %353 = vst.msk [vmem:[%s177] sm:$0xff] %vm352, %v350
        %s354 = sand.u32 %s75, 1
        %s355 = scalar_lea.sflag [#allocation4], %s354
        %s356 = sand.u32 %s75, 1
        %s357 = smul.addr %s356, 8
        %s358 = scalar_lea.vmem [#allocation7], %s357
        // Predicated region
        $region37: #{tpu_custom_call.1} parent=27 // pred_check
          %p359 = pneg %p85
        $region38: #{tpu_custom_call.1} parent=27 // pred_check_branch
          %361 = sbr.rel (%p359) target = $region40
        $region39: #{tpu_custom_call.1} parent=27 // pred_region
          %363 = vsyncadd %s355, 0
          %s364 = smul.addr %s20, 8
          %s365 = scalar_lea.hbm %s2, %s364
          %s367 = sshll.u32 %s358, 4
          %s368 = int_to_ptr.vmem [resolvable:$true] %s367
          %s369 = sshll.u32 %s365, 4
          %s370 = int_to_ptr.hbm [resolvable:$true] %s369
          %372 = dma.vmem_to_hbm [thread:$0]  %s368, 128, %s370, %s355
        $region40: #{tpu_custom_call.1} parent=27 // pred_fallthru
          _
      $region28: #{tpu_custom_call.1} parent=5 // pred_fallthru
        _
      %p373 = scmp.le.s32.totalorder 2, %s15
      // Predicated region
      $region41: #{tpu_custom_call.1} parent=5 // pred_check
        %p374 = pneg %p373
      $region42: #{tpu_custom_call.1} parent=5 // pred_check_branch
        %376 = sbr.rel (%p374) target = $region44
      $region43: #{tpu_custom_call.1} parent=5 // pred_region
        %s377 = ssub.s32 %s15, 2
        // Predicated region
        $region45: #{tpu_custom_call.1} parent=43 // pred_check
          %p378 = pneg %p91
        $region46: #{tpu_custom_call.1} parent=43 // pred_check_branch
          %380 = sbr.rel (%p378) target = $region48
        $region47: #{tpu_custom_call.1} parent=43 // pred_region
          %s381 = sand.u32 %s76, 1
          %s382 = scalar_lea.sflag [#allocation4], %s381
          %s383 = sand.u32 %s76, 1
          %s384 = smul.addr %s383, 8
          %s385 = scalar_lea.vmem [#allocation7], %s384
          %387 = dma.done %s382, 128
        $region48: #{tpu_custom_call.1} parent=43 // pred_fallthru
          _
      $region44: #{tpu_custom_call.1} parent=5 // pred_fallthru
        _
    $region6: #{tpu_custom_call.1} parent=1 // loop_footer
      %s19 = sadd.s32 1, %s15
    $region7: #{tpu_custom_call.1} parent=1 // loop_footer_branch
      %14 = sbr.rel target = $region3
    $region8: #{tpu_custom_call.1} parent=1 // loop_exit
      _
    %388 = vsyncpa [#allocation3], 1
    %s389 = scalar_lea.sflag [#allocation3], 1
    %390 = vsyncpa %s389, 1
    %391 = vsyncpa [#allocation6], 1
    %392 = vsyncpa [#allocation4], 1
    %s393 = scalar_lea.sflag [#allocation4], 1
    %394 = vsyncpa %s393, 1

</llo_original>
